<compile_context>
chip_gen: v5e
topology: v5e:2x2
jax: 0.10.0
libtpu: 0.0.40
codegen_flags: <defaults>
</compile_context>

<pallas_src>
import functools

import jax
import jax.numpy as jnp
from jax.experimental import pallas as pl
from jax.experimental.pallas import tpu as pltpu

BN_EPS = 1e-5
LANE = 128
SUBLANE = 8


def _round_up(x, m):
    return (x + m - 1) // m * m


# ----------------------------- Pallas kernel ------------------------------- #

def make_fused_mlp_kernel(num_hidden, n_valid):
    """Build a fused kernel for `num_hidden` (Linear->ReLU->BN) layers followed
    by one (Linear->ReLU) layer.  `n_valid` = number of real (unpadded) rows."""

    def kernel(x_ref, *refs):
        o_ref = refs[-1]
        p = refs[:-1]
        rows = x_ref.shape[0]

        h = x_ref[...]  # (rows, in_pad) f32, stays resident across all layers
        inv_n = jnp.float32(1.0 / n_valid)

        need_mask = n_valid != rows
        if need_mask:
            row_ids = jax.lax.broadcasted_iota(jnp.int32, (rows, 1), 0)
            valid = (row_ids < n_valid).astype(jnp.float32)  # (rows, 1)

        idx = 0
        for _ in range(num_hidden):
            w = p[idx][...]
            b = p[idx + 1][...]
            gamma = p[idx + 2][...]
            beta = p[idx + 3][...]
            idx += 4

            y = jnp.dot(h, w, preferred_element_type=jnp.float32) + b
            y = jnp.maximum(y, 0.0)                       # ReLU

            # One-pass BatchNorm statistics over the real rows only.
            ym = y * valid if need_mask else y
            s = jnp.sum(ym, axis=0, keepdims=True)        # (1, out)
            ss = jnp.sum(ym * ym, axis=0, keepdims=True)  # (1, out)
            mean = s * inv_n
            var = jnp.maximum(ss * inv_n - mean * mean, 0.0)
            scale = jax.lax.rsqrt(var + BN_EPS) * gamma   # EUP rsqrt
            h = (y - mean) * scale + beta

        # Final Linear -> ReLU.
        w = p[idx][...]
        b = p[idx + 1][...]
        y = jnp.dot(h, w, preferred_element_type=jnp.float32) + b
        o_ref[...] = jnp.maximum(y, 0.0).astype(o_ref.dtype)

    return kernel


def _full_spec(shape):
    # Whole-array block (no grid): block_shape == full array dims is always legal.
    return pl.BlockSpec(shape, lambda: (0,) * len(shape))


def _fused_mlp_call(x_pad, padded_params, n_valid):
    rows, _ = x_pad.shape
    num_hidden = len(padded_params) - 1
    out_pad = padded_params[-1][0].shape[1]

    flat = []
    for layer in padded_params:
        flat.extend(layer)  # hidden: (w, b, gamma, beta); final: (w, b)

    # Advisory cost estimate for XLA's scheduler.
    flops = 0
    bytes_accessed = x_pad.size * 4 + rows * out_pad * 4
    for layer in padded_params:
        w = layer[0]
        flops += 2 * rows * w.shape[0] * w.shape[1]
        bytes_accessed += sum(int(a.size) * 4 for a in layer)
    transcendentals = num_hidden * padded_params[0][0].shape[1]  # rsqrt per BN feature

    kernel = make_fused_mlp_kernel(num_hidden, n_valid)
    return pl.pallas_call(
        kernel,
        out_shape=jax.ShapeDtypeStruct((rows, out_pad), jnp.float32),
        in_specs=[_full_spec(x_pad.shape)] + [_full_spec(a.shape) for a in flat],
        out_specs=_full_spec((rows, out_pad)),
        compiler_params=pltpu.CompilerParams(vmem_limit_bytes=32 * 1024 * 1024),
        cost_estimate=pl.CostEstimate(
            flops=flops,
            transcendentals=transcendentals,
            bytes_accessed=bytes_accessed,
        ),
    )(x_pad, *flat)


# ------------------------------ MLP wrapper -------------------------------- #

def init_mlp_params(key, input_dim, hidden_dim, output_dim, num_layers):
    """Deterministic init mirroring torch.nn.Linear (U(-1/sqrt(fan_in), +)) and
    torch.nn.BatchNorm1d defaults (gamma=1, beta=0).  Weights are stored as
    [in_dim, out_dim] (transpose of torch's [out, in]) so the kernel computes
    x @ W + b directly on the MXU."""
    dims = [input_dim] + [hidden_dim] * (num_layers - 1) + [output_dim]
    params = []
    for li in range(num_layers):
        fan_in, fan_out = dims[li], dims[li + 1]
        key, kw, kb = jax.random.split(key, 3)
        bound = 1.0 / jnp.sqrt(float(fan_in))
        w = jax.random.uniform(kw, (fan_in, fan_out), jnp.float32, -bound, bound)
        b = jax.random.uniform(kb, (1, fan_out), jnp.float32, -bound, bound)
        if li < num_layers - 1:  # hidden layer: BatchNorm1d after ReLU
            gamma = jnp.ones((1, fan_out), jnp.float32)
            beta = jnp.zeros((1, fan_out), jnp.float32)
            params.append((w, b, gamma, beta))
        else:
            params.append((w, b))
    return params


def pad_params(params):
    """Zero-pad every parameter's feature dims to a multiple of 128 (lane-dense).
    Zero padding is numerically inert: padded columns stay exactly 0 through
    Linear/ReLU/BN and padded weight rows contribute nothing downstream."""
    padded = []
    for layer in params:
        w = layer[0]
        in_d, out_d = w.shape
        ip, op = _round_up(in_d, LANE), _round_up(out_d, LANE)
        wp = jnp.zeros((ip, op), jnp.float32).at[:in_d, :out_d].set(w)
        bp = jnp.zeros((1, op), jnp.float32).at[:, :out_d].set(layer[1])
        if len(layer) == 4:
            gp = jnp.zeros((1, op), jnp.float32).at[:, :out_d].set(layer[2])
            bep = jnp.zeros((1, op), jnp.float32).at[:, :out_d].set(layer[3])
            padded.append((wp, bp, gp, bep))
        else:
            padded.append((wp, bp))
    return padded


@functools.partial(jax.jit, static_argnames=("output_dim",))
def mlp_forward(x, padded_params, output_dim):
    orig_shape = x.shape
    if x.ndim != 2:
        x = x.reshape(-1, orig_shape[-1])  # torch: x.flatten(end_dim=-2)
    n, in_dim = x.shape
    x = x.astype(jnp.float32)

    in_pad = padded_params[0][0].shape[0]
    row_pad = _round_up(max(n, SUBLANE), SUBLANE)
    x_pad = jnp.zeros((row_pad, in_pad), jnp.float32).at[:n, :in_dim].set(x)

    out = _fused_mlp_call(x_pad, padded_params, n)
    out = out[:n, :output_dim]

    if len(orig_shape) != 2:
        out = out.reshape(orig_shape[:-1] + (output_dim,))
    return out


# ----------------------------- reference check ----------------------------- #

def mlp_reference(x, params, output_dim):
    orig_shape = x.shape
    if x.ndim != 2:
        x = x.reshape(-1, orig_shape[-1])
    h = x.astype(jnp.float32)
    for layer in params[:-1]:
        w, b, gamma, beta = layer
        y = jnp.maximum(h @ w + b, 0.0)
        mean = jnp.mean(y, axis=0, keepdims=True)
        var = jnp.mean((y - mean) ** 2, axis=0, keepdims=True)
        h = (y - mean) / jnp.sqrt(var + BN_EPS) * gamma + beta
    w, b = params[-1]
    h = jnp.maximum(h @ w + b, 0.0)
    if len(orig_shape) != 2:
        h = h.reshape(orig_shape[:-1] + (output_dim,))
    return h


if __name__ == "__main__":
    input_dim, hidden_dim, output_dim, num_layers = 16, 32, 8, 3

    key = jax.random.PRNGKey(0)
    kp, kx = jax.random.split(key)
    params = init_mlp_params(kp, input_dim, hidden_dim, output_dim, num_layers)
    padded = pad_params(params)

    # 3-D input exercises the flatten / reshape path: (2, 8, 16) -> (2, 8, 8)
    x = jax.random.normal(kx, (2, 8, input_dim), jnp.float32)

    out = mlp_forward(x, padded, output_dim=output_dim)
    out = jax.block_until_ready(out)

    ref = mlp_reference(x, params, output_dim)
    assert out.shape == (2, 8, output_dim), out.shape
    assert jnp.allclose(out, ref, atol=1e-4, rtol=1e-4), "mismatch vs reference"

    print("KERNEL_OK")
</pallas_src>

<mosaic_0001>
module attributes {stable_mosaic.version = 11 : i64} {
  func.func @kernel(%arg0: memref<16x128xf32, #tpu.memory_space<vmem>>, %arg1: memref<128x128xf32, #tpu.memory_space<vmem>>, %arg2: memref<1x128xf32, #tpu.memory_space<vmem>>, %arg3: memref<1x128xf32, #tpu.memory_space<vmem>>, %arg4: memref<1x128xf32, #tpu.memory_space<vmem>>, %arg5: memref<128x128xf32, #tpu.memory_space<vmem>>, %arg6: memref<1x128xf32, #tpu.memory_space<vmem>>, %arg7: memref<1x128xf32, #tpu.memory_space<vmem>>, %arg8: memref<1x128xf32, #tpu.memory_space<vmem>>, %arg9: memref<128x128xf32, #tpu.memory_space<vmem>>, %arg10: memref<1x128xf32, #tpu.memory_space<vmem>>, %arg11: memref<16x128xf32, #tpu.memory_space<vmem>>) attributes {dimension_semantics = [], scalar_prefetch = 0 : i64, scratch_operands = 0 : i64, tpu.core_type = #tpu.core_type<tc>} {
    %c0 = arith.constant 0 : index
    %c0_0 = arith.constant 0 : index
    %0 = vector.load %arg0[%c0, %c0_0] : memref<16x128xf32, #tpu.memory_space<vmem>>, vector<16x128xf32>
    %c0_1 = arith.constant 0 : index
    %c0_2 = arith.constant 0 : index
    %1 = vector.load %arg1[%c0_1, %c0_2] : memref<128x128xf32, #tpu.memory_space<vmem>>, vector<128x128xf32>
    %c0_3 = arith.constant 0 : index
    %c0_4 = arith.constant 0 : index
    %2 = vector.load %arg2[%c0_3, %c0_4] : memref<1x128xf32, #tpu.memory_space<vmem>>, vector<1x128xf32>
    %c0_5 = arith.constant 0 : index
    %c0_6 = arith.constant 0 : index
    %3 = vector.load %arg3[%c0_5, %c0_6] : memref<1x128xf32, #tpu.memory_space<vmem>>, vector<1x128xf32>
    %c0_7 = arith.constant 0 : index
    %c0_8 = arith.constant 0 : index
    %4 = vector.load %arg4[%c0_7, %c0_8] : memref<1x128xf32, #tpu.memory_space<vmem>>, vector<1x128xf32>
    %cst = arith.constant dense<0.000000e+00> : vector<16x128xf32>
    %5 = tpu.matmul %0, %1, %cst {dimension_numbers = #tpu.dot_dimension_numbers<[1], [0], [0], [1], [0, 0, 1, 1], [], []>} : vector<16x128xf32>, vector<128x128xf32>, vector<16x128xf32> -> vector<16x128xf32>
    %6 = vector.broadcast %2 : vector<1x128xf32> to vector<16x128xf32>
    %7 = arith.addf %5, %6 : vector<16x128xf32>
    %cst_9 = arith.constant 0.000000e+00 : f32
    %8 = vector.broadcast %cst_9 : f32 to vector<16x128xf32>
    %9 = arith.maximumf %7, %8 : vector<16x128xf32>
    %cst_10 = arith.constant dense<0.000000e+00> : vector<128xf32>
    %10 = vector.multi_reduction <add>, %9, %cst_10 [0] : vector<16x128xf32> to vector<128xf32>
    %11 = vector.shape_cast %10 : vector<128xf32> to vector<1x128xf32>
    %12 = arith.mulf %9, %9 : vector<16x128xf32>
    %cst_11 = arith.constant dense<0.000000e+00> : vector<128xf32>
    %13 = vector.multi_reduction <add>, %12, %cst_11 [0] : vector<16x128xf32> to vector<128xf32>
    %14 = vector.shape_cast %13 : vector<128xf32> to vector<1x128xf32>
    %cst_12 = arith.constant 6.250000e-02 : f32
    %15 = vector.broadcast %cst_12 : f32 to vector<1x128xf32>
    %16 = arith.mulf %11, %15 : vector<1x128xf32>
    %cst_13 = arith.constant 6.250000e-02 : f32
    %17 = vector.broadcast %cst_13 : f32 to vector<1x128xf32>
    %18 = arith.mulf %14, %17 : vector<1x128xf32>
    %19 = arith.mulf %16, %16 : vector<1x128xf32>
    %20 = arith.subf %18, %19 : vector<1x128xf32>
    %cst_14 = arith.constant 0.000000e+00 : f32
    %21 = vector.broadcast %cst_14 : f32 to vector<1x128xf32>
    %22 = arith.maximumf %20, %21 : vector<1x128xf32>
    %cst_15 = arith.constant 9.99999974E-6 : f32
    %23 = vector.broadcast %cst_15 : f32 to vector<1x128xf32>
    %24 = arith.addf %22, %23 : vector<1x128xf32>
    %25 = math.rsqrt %24 : vector<1x128xf32>
    %26 = arith.mulf %25, %3 : vector<1x128xf32>
    %27 = vector.broadcast %16 : vector<1x128xf32> to vector<16x128xf32>
    %28 = arith.subf %9, %27 : vector<16x128xf32>
    %29 = vector.broadcast %26 : vector<1x128xf32> to vector<16x128xf32>
    %30 = arith.mulf %28, %29 : vector<16x128xf32>
    %31 = vector.broadcast %4 : vector<1x128xf32> to vector<16x128xf32>
    %32 = arith.addf %30, %31 : vector<16x128xf32>
    %c0_16 = arith.constant 0 : index
    %c0_17 = arith.constant 0 : index
    %33 = vector.load %arg5[%c0_16, %c0_17] : memref<128x128xf32, #tpu.memory_space<vmem>>, vector<128x128xf32>
    %c0_18 = arith.constant 0 : index
    %c0_19 = arith.constant 0 : index
    %34 = vector.load %arg6[%c0_18, %c0_19] : memref<1x128xf32, #tpu.memory_space<vmem>>, vector<1x128xf32>
    %c0_20 = arith.constant 0 : index
    %c0_21 = arith.constant 0 : index
    %35 = vector.load %arg7[%c0_20, %c0_21] : memref<1x128xf32, #tpu.memory_space<vmem>>, vector<1x128xf32>
    %c0_22 = arith.constant 0 : index
    %c0_23 = arith.constant 0 : index
    %36 = vector.load %arg8[%c0_22, %c0_23] : memref<1x128xf32, #tpu.memory_space<vmem>>, vector<1x128xf32>
    %cst_24 = arith.constant dense<0.000000e+00> : vector<16x128xf32>
    %37 = tpu.matmul %32, %33, %cst_24 {dimension_numbers = #tpu.dot_dimension_numbers<[1], [0], [0], [1], [0, 0, 1, 1], [], []>} : vector<16x128xf32>, vector<128x128xf32>, vector<16x128xf32> -> vector<16x128xf32>
    %38 = vector.broadcast %34 : vector<1x128xf32> to vector<16x128xf32>
    %39 = arith.addf %37, %38 : vector<16x128xf32>
    %cst_25 = arith.constant 0.000000e+00 : f32
    %40 = vector.broadcast %cst_25 : f32 to vector<16x128xf32>
    %41 = arith.maximumf %39, %40 : vector<16x128xf32>
    %cst_26 = arith.constant dense<0.000000e+00> : vector<128xf32>
    %42 = vector.multi_reduction <add>, %41, %cst_26 [0] : vector<16x128xf32> to vector<128xf32>
    %43 = vector.shape_cast %42 : vector<128xf32> to vector<1x128xf32>
    %44 = arith.mulf %41, %41 : vector<16x128xf32>
    %cst_27 = arith.constant dense<0.000000e+00> : vector<128xf32>
    %45 = vector.multi_reduction <add>, %44, %cst_27 [0] : vector<16x128xf32> to vector<128xf32>
    %46 = vector.shape_cast %45 : vector<128xf32> to vector<1x128xf32>
    %cst_28 = arith.constant 6.250000e-02 : f32
    %47 = vector.broadcast %cst_28 : f32 to vector<1x128xf32>
    %48 = arith.mulf %43, %47 : vector<1x128xf32>
    %cst_29 = arith.constant 6.250000e-02 : f32
    %49 = vector.broadcast %cst_29 : f32 to vector<1x128xf32>
    %50 = arith.mulf %46, %49 : vector<1x128xf32>
    %51 = arith.mulf %48, %48 : vector<1x128xf32>
    %52 = arith.subf %50, %51 : vector<1x128xf32>
    %cst_30 = arith.constant 0.000000e+00 : f32
    %53 = vector.broadcast %cst_30 : f32 to vector<1x128xf32>
    %54 = arith.maximumf %52, %53 : vector<1x128xf32>
    %cst_31 = arith.constant 9.99999974E-6 : f32
    %55 = vector.broadcast %cst_31 : f32 to vector<1x128xf32>
    %56 = arith.addf %54, %55 : vector<1x128xf32>
    %57 = math.rsqrt %56 : vector<1x128xf32>
    %58 = arith.mulf %57, %35 : vector<1x128xf32>
    %59 = vector.broadcast %48 : vector<1x128xf32> to vector<16x128xf32>
    %60 = arith.subf %41, %59 : vector<16x128xf32>
    %61 = vector.broadcast %58 : vector<1x128xf32> to vector<16x128xf32>
    %62 = arith.mulf %60, %61 : vector<16x128xf32>
    %63 = vector.broadcast %36 : vector<1x128xf32> to vector<16x128xf32>
    %64 = arith.addf %62, %63 : vector<16x128xf32>
    %c0_32 = arith.constant 0 : index
    %c0_33 = arith.constant 0 : index
    %65 = vector.load %arg9[%c0_32, %c0_33] : memref<128x128xf32, #tpu.memory_space<vmem>>, vector<128x128xf32>
    %c0_34 = arith.constant 0 : index
    %c0_35 = arith.constant 0 : index
    %66 = vector.load %arg10[%c0_34, %c0_35] : memref<1x128xf32, #tpu.memory_space<vmem>>, vector<1x128xf32>
    %cst_36 = arith.constant dense<0.000000e+00> : vector<16x128xf32>
    %67 = tpu.matmul %64, %65, %cst_36 {dimension_numbers = #tpu.dot_dimension_numbers<[1], [0], [0], [1], [0, 0, 1, 1], [], []>} : vector<16x128xf32>, vector<128x128xf32>, vector<16x128xf32> -> vector<16x128xf32>
    %68 = vector.broadcast %66 : vector<1x128xf32> to vector<16x128xf32>
    %69 = arith.addf %67, %68 : vector<16x128xf32>
    %cst_37 = arith.constant 0.000000e+00 : f32
    %70 = vector.broadcast %cst_37 : f32 to vector<16x128xf32>
    %71 = arith.maximumf %69, %70 : vector<16x128xf32>
    %c0_38 = arith.constant 0 : index
    %c0_39 = arith.constant 0 : index
    %72 = vector.load %arg11[%c0_38, %c0_39] : memref<16x128xf32, #tpu.memory_space<vmem>>, vector<16x128xf32>
    tpu.vector_store %arg11[%c0_38, %c0_39], %71 {strides = array<i32>} : memref<16x128xf32, #tpu.memory_space<vmem>>, vector<16x128xf32>,
    return
  }
}

</mosaic_0001>

<llo_original>
// kernel: mlp_forward.1
$region0: #{mlp_forward.1}
  #allocation0 [shape = 'u32[]', space=smem, size = 0x4, offset = 0x4, fixed_abs, tag = 'smem constant byte address 0x4 - core index']
  #allocation1 [shape = 'u32[72,128]{1,0:T(1,128)}', space=vmem, size = 0x9000, scoped, tag = 'internal scratch']
  %s0 = inlined_call_operand.vmem [shape: f32[16,128], index: 0, kind: input, shape index: {}]
  %s1 = inlined_call_operand.hbm [shape: f32[128,128], index: 1, kind: input, shape index: {}]
  %s2 = inlined_call_operand.vmem [shape: f32[1,128], index: 2, kind: input, shape index: {}]
  %s3 = inlined_call_operand.vmem [shape: f32[1,128], index: 3, kind: input, shape index: {}]
  %s4 = inlined_call_operand.vmem [shape: f32[1,128], index: 4, kind: input, shape index: {}]
  %s5 = inlined_call_operand.hbm [shape: f32[128,128], index: 5, kind: input, shape index: {}]
  %s6 = inlined_call_operand.vmem [shape: f32[1,128], index: 6, kind: input, shape index: {}]
  %s7 = inlined_call_operand.vmem [shape: f32[1,128], index: 7, kind: input, shape index: {}]
  %s8 = inlined_call_operand.vmem [shape: f32[1,128], index: 8, kind: input, shape index: {}]
  %s9 = inlined_call_operand.hbm [shape: f32[128,128], index: 9, kind: input, shape index: {}]
  %s10 = inlined_call_operand.vmem [shape: f32[1,128], index: 10, kind: input, shape index: {}]
  %s11 = inlined_call_operand.vmem [shape: f32[16,128], index: 11, kind: output, shape index: {}]
  %s12 = sld [smem:[#allocation0]]
  $region66: #{mlp_forward.1} parent=0
    _
  %s14 = ssub.s32 1, %s12
  %s15 = scalar_select 0, %s14, %s12
  $region1: #{mlp_forward.1} parent=0
    #allocation2 [shape = 'u8[65536]{0}', space=vmem, size = 0x10000, scoped, tag = 'input window, operand 1, single buffered']
    #allocation3 [shape = 's32[1]{0}', space=sflag, size = 0x4, scoped, tag = 'scoped memory for mlp_forward.1']
    #allocation4 [shape = 'u8[65536]{0}', space=vmem, size = 0x10000, scoped, tag = 'input window, operand 5, single buffered']
    #allocation5 [shape = 's32[1]{0}', space=sflag, size = 0x4, scoped, tag = 'scoped memory for mlp_forward.1']
    #allocation6 [shape = 'u8[65536]{0}', space=vmem, size = 0x10000, scoped, tag = 'input window, operand 9, single buffered']
    %16 = vsyncpa [#allocation3], 0
    %17 = vsyncpa [#allocation5], 0
    // Predicated region
    $region2: #{mlp_forward.1} parent=1 // pred_check
      _
    $region3: #{mlp_forward.1} parent=1 // pred_check_branch
      %19 = sbr.rel (0) target = $region5
    $region4: #{mlp_forward.1} parent=1 // pred_region
      _
    $region5: #{mlp_forward.1} parent=1 // pred_fallthru
      _
    // Predicated region
    $region6: #{mlp_forward.1} parent=1 // pred_check
      _
    $region7: #{mlp_forward.1} parent=1 // pred_check_branch
      %21 = sbr.rel (0) target = $region9
    $region8: #{mlp_forward.1} parent=1 // pred_region
      %23 = vsyncadd [#allocation3], 0
      %s24 = sshll.u32 %s1, 4
      %s25 = int_to_ptr.hbm [resolvable:$true] %s24
      %s26 = sshll.u32 [#allocation2], 4
      %s27 = int_to_ptr.vmem [resolvable:$true] %s26
      %32 = dma.hbm_to_vmem [thread:$0]  %s25, 2048, %s27, [#allocation3], 128, 128, 8
    $region9: #{mlp_forward.1} parent=1 // pred_fallthru
      _
    // Predicated region
    $region10: #{mlp_forward.1} parent=1 // pred_check
      _
    $region11: #{mlp_forward.1} parent=1 // pred_check_branch
      %34 = sbr.rel (0) target = $region13
    $region12: #{mlp_forward.1} parent=1 // pred_region
      _
    $region13: #{mlp_forward.1} parent=1 // pred_fallthru
      _
    // Predicated region
    $region14: #{mlp_forward.1} parent=1 // pred_check
      _
    $region15: #{mlp_forward.1} parent=1 // pred_check_branch
      %36 = sbr.rel (0) target = $region17
    $region16: #{mlp_forward.1} parent=1 // pred_region
      _
    $region17: #{mlp_forward.1} parent=1 // pred_fallthru
      _
    // Predicated region
    $region18: #{mlp_forward.1} parent=1 // pred_check
      _
    $region19: #{mlp_forward.1} parent=1 // pred_check_branch
      %38 = sbr.rel (0) target = $region21
    $region20: #{mlp_forward.1} parent=1 // pred_region
      _
    $region21: #{mlp_forward.1} parent=1 // pred_fallthru
      _
    // Predicated region
    $region22: #{mlp_forward.1} parent=1 // pred_check
      _
    $region23: #{mlp_forward.1} parent=1 // pred_check_branch
      %40 = sbr.rel (0) target = $region25
    $region24: #{mlp_forward.1} parent=1 // pred_region
      %42 = vsyncadd [#allocation5], 0
      %s43 = sshll.u32 %s5, 4
      %s44 = int_to_ptr.hbm [resolvable:$true] %s43
      %s45 = sshll.u32 [#allocation4], 4
      %s46 = int_to_ptr.vmem [resolvable:$true] %s45
      %51 = dma.hbm_to_vmem [thread:$0]  %s44, 2048, %s46, [#allocation5], 128, 128, 8
    $region25: #{mlp_forward.1} parent=1 // pred_fallthru
      _
    // Predicated region
    $region26: #{mlp_forward.1} parent=1 // pred_check
      _
    $region27: #{mlp_forward.1} parent=1 // pred_check_branch
      %53 = sbr.rel (0) target = $region29
    $region28: #{mlp_forward.1} parent=1 // pred_region
      _
    $region29: #{mlp_forward.1} parent=1 // pred_fallthru
      _
    // Predicated region
    $region30: #{mlp_forward.1} parent=1 // pred_check
      _
    $region31: #{mlp_forward.1} parent=1 // pred_check_branch
      %55 = sbr.rel (0) target = $region33
    $region32: #{mlp_forward.1} parent=1 // pred_region
      _
    $region33: #{mlp_forward.1} parent=1 // pred_fallthru
      _
    // Predicated region
    $region34: #{mlp_forward.1} parent=1 // pred_check
      _
    $region35: #{mlp_forward.1} parent=1 // pred_check_branch
      %57 = sbr.rel (0) target = $region37
    $region36: #{mlp_forward.1} parent=1 // pred_region
      _
    $region37: #{mlp_forward.1} parent=1 // pred_fallthru
      _
    // Predicated region
    $region38: #{mlp_forward.1} parent=1 // pred_check
      _
    $region39: #{mlp_forward.1} parent=1 // pred_check_branch
      %59 = sbr.rel (0) target = $region41
    $region40: #{mlp_forward.1} parent=1 // pred_region
      %61 = vsyncadd [#allocation5], 0
      %s62 = sshll.u32 %s9, 4
      %s63 = int_to_ptr.hbm [resolvable:$true] %s62
      %s64 = sshll.u32 [#allocation6], 4
      %s65 = int_to_ptr.vmem [resolvable:$true] %s64
      %70 = dma.hbm_to_vmem [thread:$0]  %s63, 2048, %s65, [#allocation5], 128, 128, 8
    $region41: #{mlp_forward.1} parent=1 // pred_fallthru
      _
    // Predicated region
    $region42: #{mlp_forward.1} parent=1 // pred_check
      _
    $region43: #{mlp_forward.1} parent=1 // pred_check_branch
      %72 = sbr.rel (0) target = $region45
    $region44: #{mlp_forward.1} parent=1 // pred_region
      _
    $region45: #{mlp_forward.1} parent=1 // pred_fallthru
      _
    // Predicated region
    $region46: #{mlp_forward.1} parent=1 // pred_check
      _
    $region47: #{mlp_forward.1} parent=1 // pred_check_branch
      %74 = sbr.rel (0) target = $region49
    $region48: #{mlp_forward.1} parent=1 // pred_region
      %76 = dma.done [#allocation3], 2048
    $region49: #{mlp_forward.1} parent=1 // pred_fallthru
      _
    // Predicated region
    $region50: #{mlp_forward.1} parent=1 // pred_check
      _
    $region51: #{mlp_forward.1} parent=1 // pred_check_branch
      %78 = sbr.rel (0) target = $region53
    $region52: #{mlp_forward.1} parent=1 // pred_region
      %80 = dma.done [#allocation5], 2048
    $region53: #{mlp_forward.1} parent=1 // pred_fallthru
      _
    // Predicated region
    $region54: #{mlp_forward.1} parent=1 // pred_check
      _
    $region55: #{mlp_forward.1} parent=1 // pred_check_branch
      %82 = sbr.rel (0) target = $region57
    $region56: #{mlp_forward.1} parent=1 // pred_region
      %84 = dma.done [#allocation5], 2048
    $region57: #{mlp_forward.1} parent=1 // pred_fallthru
      _
    %v85 = vld [vmem:[%s0] sm:$0xff]
    %v86 = vld [vmem:[%s0 + $0x8] sm:$0xff]
    %v87 = vld [vmem:[#allocation2] sm:$0xff]
    %v88 = vld [vmem:[#allocation2 + $0x8] sm:$0xff]
    %v89 = vld [vmem:[#allocation2 + $0x10] sm:$0xff]
    %v90 = vld [vmem:[#allocation2 + $0x18] sm:$0xff]
    %v91 = vld [vmem:[#allocation2 + $0x20] sm:$0xff]
    %v92 = vld [vmem:[#allocation2 + $0x28] sm:$0xff]
    %v93 = vld [vmem:[#allocation2 + $0x30] sm:$0xff]
    %v94 = vld [vmem:[#allocation2 + $0x38] sm:$0xff]
    %v95 = vld [vmem:[#allocation2 + $0x40] sm:$0xff]
    %v96 = vld [vmem:[#allocation2 + $0x48] sm:$0xff]
    %v97 = vld [vmem:[#allocation2 + $0x50] sm:$0xff]
    %v98 = vld [vmem:[#allocation2 + $0x58] sm:$0xff]
    %v99 = vld [vmem:[#allocation2 + $0x60] sm:$0xff]
    %v100 = vld [vmem:[#allocation2 + $0x68] sm:$0xff]
    %v101 = vld [vmem:[#allocation2 + $0x70] sm:$0xff]
    %v102 = vld [vmem:[#allocation2 + $0x78] sm:$0xff]
    %v103 = vld [vmem:[%s2] sm:$0x1]
    %v104 = vld [vmem:[%s3] sm:$0x1]
    %v105 = vld [vmem:[%s4] sm:$0x1]
    %v107 = vperm.slane %v103, 0
    %109 = vmatpush.msra.mxu0 %v102
    %110 = vmatpush.msra.mxu0 %v101
    %111 = vmatpush.msra.mxu0 %v100
    %112 = vmatpush.msra.mxu0 %v99
    %113 = vmatpush.msra.mxu0 %v98
    %114 = vmatpush.msra.mxu0 %v97
    %115 = vmatpush.msra.mxu0 %v96
    %116 = vmatpush.msra.mxu0 %v95
    %117 = vmatpush.msra.mxu0 %v94
    %118 = vmatpush.msra.mxu0 %v93
    %119 = vmatpush.msra.mxu0 %v92
    %120 = vmatpush.msra.mxu0 %v91
    %121 = vmatpush.msra.mxu0 %v90
    %122 = vmatpush.msra.mxu0 %v89
    %123 = vmatpush.msra.mxu0 %v88
    %124 = vmatpush.msra.mxu0 %v87
    %125 = vmatmul.f32.gmra.mxu0 %v85
    %v126 = vpop.f32.mrf.mxu0
    %v127 = vadd.f32 %v107, %v126
    %128 = vmatmul.f32.gmra.mxu0 %v86
    %v129 = vpop.f32.mrf.mxu0
    %v130 = vadd.f32 %v107, %v129
    %131 = vdwg.mxu0
    %v132 = vmax.f32 %v127, 0.0
    %v133 = vmax.f32 %v130, 0.0
    %v134 = vadd.f32 %v132, %v133
    %v135 = vrot.slane %v134, 4
    %v136 = vadd.f32 %v134, %v135
    %v137 = vrot.slane %v136, 2
    %v138 = vadd.f32 %v136, %v137
    %v139 = vrot.slane %v138, 1
    %v140 = vadd.f32 %v138, %v139
    %v141 = vmul.f32 %v132, %v132
    %v142 = vmul.f32 %v133, %v133
    %v143 = vadd.f32 %v141, %v142
    %v144 = vrot.slane %v143, 4
    %v145 = vadd.f32 %v143, %v144
    %v146 = vrot.slane %v145, 2
    %v147 = vadd.f32 %v145, %v146
    %v148 = vrot.slane %v147, 1
    %v149 = vadd.f32 %v147, %v148
    %v150 = vmul.f32 %v140, 0.0625
    %v151 = vmul.f32 %v149, 0.0625
    %v152 = vmul.f32 %v150, %v150
    %v153 = vsub.f32 %v151, %v152
    %v154 = vmax.f32 %v153, 0.0
    %v155 = vadd.f32 %v154, 1e-05
    %v156 = vrsqrt.pop %v155
    %v157 = vmul.f32 %v156, %v155
    %v158 = vmul.f32 %v157, %v156
    %v159 = vmul.f32 0.5, %v158
    %v160 = vsub.f32 1.5, %v159
    %v161 = vmul.f32 %v156, %v160
    %vm162 = vweird.f32 %v155
    %vm163 = vweird.f32 %v156
    %vm164 = vmor %vm162, %vm163
    %v165 = vsel %vm164, %v156, %v161
    %v166 = vmul.f32 %v165, %v104
    %v167 = vsub.f32 %v132, %v150
    %v168 = vsub.f32 %v133, %v150
    %v169 = vperm.slane %v166, 0
    %v170 = vmul.f32 %v167, %v169
    %v171 = vmul.f32 %v168, %v169
    %v173 = vperm.slane %v105, 0
    %v175 = vadd.f32 %v170, %v173
    %v176 = vadd.f32 %v171, %v173
    %v177 = vld [vmem:[#allocation4] sm:$0xff]
    %v178 = vld [vmem:[#allocation4 + $0x8] sm:$0xff]
    %v179 = vld [vmem:[#allocation4 + $0x10] sm:$0xff]
    %v180 = vld [vmem:[#allocation4 + $0x18] sm:$0xff]
    %v181 = vld [vmem:[#allocation4 + $0x20] sm:$0xff]
    %v182 = vld [vmem:[#allocation4 + $0x28] sm:$0xff]
    %v183 = vld [vmem:[#allocation4 + $0x30] sm:$0xff]
    %v184 = vld [vmem:[#allocation4 + $0x38] sm:$0xff]
    %v185 = vld [vmem:[#allocation4 + $0x40] sm:$0xff]
    %v186 = vld [vmem:[#allocation4 + $0x48] sm:$0xff]
    %v187 = vld [vmem:[#allocation4 + $0x50] sm:$0xff]
    %v188 = vld [vmem:[#allocation4 + $0x58] sm:$0xff]
    %v189 = vld [vmem:[#allocation4 + $0x60] sm:$0xff]
    %v190 = vld [vmem:[#allocation4 + $0x68] sm:$0xff]
    %v191 = vld [vmem:[#allocation4 + $0x70] sm:$0xff]
    %v192 = vld [vmem:[#allocation4 + $0x78] sm:$0xff]
    %v193 = vld [vmem:[%s6] sm:$0x1]
    %v194 = vld [vmem:[%s7] sm:$0x1]
    %v195 = vld [vmem:[%s8] sm:$0x1]
    %v197 = vperm.slane %v193, 0
    %199 = vmatpush.msra.mxu0 %v192
    %200 = vmatpush.msra.mxu0 %v191
    %201 = vmatpush.msra.mxu0 %v190
    %202 = vmatpush.msra.mxu0 %v189
    %203 = vmatpush.msra.mxu0 %v188
    %204 = vmatpush.msra.mxu0 %v187
    %205 = vmatpush.msra.mxu0 %v186
    %206 = vmatpush.msra.mxu0 %v185
    %207 = vmatpush.msra.mxu0 %v184
    %208 = vmatpush.msra.mxu0 %v183
    %209 = vmatpush.msra.mxu0 %v182
    %210 = vmatpush.msra.mxu0 %v181
    %211 = vmatpush.msra.mxu0 %v180
    %212 = vmatpush.msra.mxu0 %v179
    %213 = vmatpush.msra.mxu0 %v178
    %214 = vmatpush.msra.mxu0 %v177
    %215 = vmatmul.f32.gmra.mxu0 %v175
    %v216 = vpop.f32.mrf.mxu0
    %v217 = vadd.f32 %v197, %v216
    %218 = vmatmul.f32.gmra.mxu0 %v176
    %v219 = vpop.f32.mrf.mxu0
    %v220 = vadd.f32 %v197, %v219
    %221 = vdwg.mxu0
    %v222 = vmax.f32 %v217, 0.0
    %v223 = vmax.f32 %v220, 0.0
    %v224 = vadd.f32 %v222, %v223
    %v225 = vrot.slane %v224, 4
    %v226 = vadd.f32 %v224, %v225
    %v227 = vrot.slane %v226, 2
    %v228 = vadd.f32 %v226, %v227
    %v229 = vrot.slane %v228, 1
    %v230 = vadd.f32 %v228, %v229
    %v231 = vmul.f32 %v222, %v222
    %v232 = vmul.f32 %v223, %v223
    %v233 = vadd.f32 %v231, %v232
    %v234 = vrot.slane %v233, 4
    %v235 = vadd.f32 %v233, %v234
    %v236 = vrot.slane %v235, 2
    %v237 = vadd.f32 %v235, %v236
    %v238 = vrot.slane %v237, 1
    %v239 = vadd.f32 %v237, %v238
    %v240 = vmul.f32 %v230, 0.0625
    %v241 = vmul.f32 %v239, 0.0625
    %v242 = vmul.f32 %v240, %v240
    %v243 = vsub.f32 %v241, %v242
    %v244 = vmax.f32 %v243, 0.0
    %v245 = vadd.f32 %v244, 1e-05
    %v246 = vrsqrt.pop %v245
    %v247 = vmul.f32 %v246, %v245
    %v248 = vmul.f32 %v247, %v246
    %v249 = vmul.f32 0.5, %v248
    %v250 = vsub.f32 1.5, %v249
    %v251 = vmul.f32 %v246, %v250
    %vm252 = vweird.f32 %v245
    %vm253 = vweird.f32 %v246
    %vm254 = vmor %vm252, %vm253
    %v255 = vsel %vm254, %v246, %v251
    %v256 = vmul.f32 %v255, %v194
    %v257 = vsub.f32 %v222, %v240
    %v258 = vsub.f32 %v223, %v240
    %v259 = vperm.slane %v256, 0
    %v260 = vmul.f32 %v257, %v259
    %v261 = vmul.f32 %v258, %v259
    %v263 = vperm.slane %v195, 0
    %v265 = vadd.f32 %v260, %v263
    %v266 = vadd.f32 %v261, %v263
    %v267 = vld [vmem:[#allocation6] sm:$0xff]
    %v268 = vld [vmem:[#allocation6 + $0x8] sm:$0xff]
    %v269 = vld [vmem:[#allocation6 + $0x10] sm:$0xff]
    %v270 = vld [vmem:[#allocation6 + $0x18] sm:$0xff]
    %v271 = vld [vmem:[#allocation6 + $0x20] sm:$0xff]
    %v272 = vld [vmem:[#allocation6 + $0x28] sm:$0xff]
    %v273 = vld [vmem:[#allocation6 + $0x30] sm:$0xff]
    %v274 = vld [vmem:[#allocation6 + $0x38] sm:$0xff]
    %v275 = vld [vmem:[#allocation6 + $0x40] sm:$0xff]
    %v276 = vld [vmem:[#allocation6 + $0x48] sm:$0xff]
    %v277 = vld [vmem:[#allocation6 + $0x50] sm:$0xff]
    %v278 = vld [vmem:[#allocation6 + $0x58] sm:$0xff]
    %v279 = vld [vmem:[#allocation6 + $0x60] sm:$0xff]
    %v280 = vld [vmem:[#allocation6 + $0x68] sm:$0xff]
    %v281 = vld [vmem:[#allocation6 + $0x70] sm:$0xff]
    %v282 = vld [vmem:[#allocation6 + $0x78] sm:$0xff]
    %v283 = vld [vmem:[%s10] sm:$0x1]
    %v285 = vperm.slane %v283, 0
    %287 = vmatpush.msra.mxu0 %v282
    %288 = vmatpush.msra.mxu0 %v281
    %289 = vmatpush.msra.mxu0 %v280
    %290 = vmatpush.msra.mxu0 %v279
    %291 = vmatpush.msra.mxu0 %v278
    %292 = vmatpush.msra.mxu0 %v277
    %293 = vmatpush.msra.mxu0 %v276
    %294 = vmatpush.msra.mxu0 %v275
    %295 = vmatpush.msra.mxu0 %v274
    %296 = vmatpush.msra.mxu0 %v273
    %297 = vmatpush.msra.mxu0 %v272
    %298 = vmatpush.msra.mxu0 %v271
    %299 = vmatpush.msra.mxu0 %v270
    %300 = vmatpush.msra.mxu0 %v269
    %301 = vmatpush.msra.mxu0 %v268
    %302 = vmatpush.msra.mxu0 %v267
    %303 = vmatmul.f32.gmra.mxu0 %v265
    %v304 = vpop.f32.mrf.mxu0
    %v305 = vadd.f32 %v285, %v304
    %306 = vmatmul.f32.gmra.mxu0 %v266
    %v307 = vpop.f32.mrf.mxu0
    %v308 = vadd.f32 %v285, %v307
    %309 = vdwg.mxu0
    %v310 = vmax.f32 %v305, 0.0
    %v311 = vmax.f32 %v308, 0.0
    %312 = vst [vmem:[%s11] sm:$0xff] %v310
    %313 = vst [vmem:[%s11 + $0x8] sm:$0xff] %v311
    // Predicated region
    $region58: #{mlp_forward.1} parent=1 // pred_check
      _
    $region59: #{mlp_forward.1} parent=1 // pred_check_branch
      %315 = sbr.rel (0) target = $region61
    $region60: #{mlp_forward.1} parent=1 // pred_region
      _
    $region61: #{mlp_forward.1} parent=1 // pred_fallthru
      _
    // Predicated region
    $region62: #{mlp_forward.1} parent=1 // pred_check
      _
    $region63: #{mlp_forward.1} parent=1 // pred_check_branch
      %317 = sbr.rel (0) target = $region65
    $region64: #{mlp_forward.1} parent=1 // pred_region
      _
    $region65: #{mlp_forward.1} parent=1 // pred_fallthru
      _
    %318 = vsyncpa [#allocation3], 1
    %319 = vsyncpa [#allocation5], 1

</llo_original>
